<compile_context>
chip_gen: v5e
topology: v5e:2x2
jax: 0.10.0
libtpu: 0.0.40
codegen_flags: <defaults>
</compile_context>

<pallas_src>
import functools

import jax
import jax.numpy as jnp
from jax.experimental import pallas as pl
from jax.experimental.pallas import tpu as pltpu


def _cdiv(a: int, b: int) -> int:
    return -(-a // b)


def _round_up(x: int, m: int) -> int:
    return _cdiv(x, m) * m


def _sublane_multiple(dtype) -> int:
    # f32 -> 8, bf16/f16 -> 16, int8/fp8 -> 32 (sub-32-bit dtypes pack along sublanes).
    return max(8, 32 // jnp.dtype(dtype).itemsize)


# ----------------------------- tiled (VMEM) path -----------------------------


def _chomp_copy_kernel(x_ref, o_ref):
    # The input BlockSpec uses the same block shape / index_map as the output and
    # covers only the first L_out columns, so the body is a pure whole-tile copy.
    # Edge blocks may over-read into the chomped tail / padding; the output store
    # is bounds-masked by Pallas, so that is benign (tested with l_out < 128 and
    # l_out % tl != 0 below).
    o_ref[...] = x_ref[...]


def _choose_tiles(m, l_out, itemsize, sublane, block_rows, block_cols,
                  vmem_budget_bytes, total_out_bytes):
    lane = 128
    m_pad = _round_up(m, sublane)
    l_pad = _round_up(l_out, lane)
    # One tile's budget: input + output, each double-buffered by the pipeline.
    tile_budget = max(vmem_budget_bytes // 4, sublane * lane * itemsize)

    if block_rows is not None or block_cols is not None:
        tm = _round_up(min(block_rows or m_pad, m_pad), sublane)
        tl = _round_up(min(block_cols or l_pad, l_pad), lane)
        return tm, tl

    if sublane * l_pad * itemsize <= tile_budget:
        # Preferred: full-width column block. Output tiles are contiguous HBM
        # slabs (dense DMA descriptors, unmasked stores) and the strided input
        # read uses the largest possible per-row segment.
        tl = l_pad
        tm_cap = max((tile_budget // (tl * itemsize)) // sublane * sublane, sublane)
        tm = min(m_pad, tm_cap)
        # v7x has 2 TensorCores: once the copy is big enough to matter, keep at
        # least 2 row blocks so both cores stream (one extra step is negligible).
        if total_out_bytes > (4 << 20) and tm >= m_pad and m_pad > sublane:
            tm = _round_up(_cdiv(m, 2), sublane)
        return tm, tl

    # Sequence too long for a full-width block at this budget: 2-D tiling fallback.
    tm = min(m_pad, _round_up(256, sublane))
    tl_cap = max((tile_budget // (tm * itemsize)) // lane * lane, lane)
    tl = min(l_pad, tl_cap)
    return tm, tl


# --------------------------- direct HBM->HBM path ----------------------------


def _chomp_dma_kernel(x_hbm, o_hbm, sem, *, l_out, row_bounds):
    # Strided HBM->HBM copy performed entirely by the DMA engine; a few row
    # chunks are kept in flight to hide descriptor-issue latency.
    copies = []
    for k, (lo, hi) in enumerate(row_bounds):
        cp = pltpu.make_async_copy(
            x_hbm.at[pl.ds(lo, hi - lo), pl.ds(0, l_out)],
            o_hbm.at[pl.ds(lo, hi - lo)],
            sem.at[k],
        )
        cp.start()
        copies.append(cp)
    for cp in copies:
        cp.wait()


# --------------------------------- wrapper ------------------------------------


def chomp1d(
    x: jax.Array,
    chomp_size: int,
    *,
    mode: str = "tiled",
    block_rows: int | None = None,
    block_cols: int | None = None,
    vmem_budget_bytes: int = 32 << 20,
    min_pallas_bytes: int = 1 << 20,
    force_pallas: bool = False,
) -> jax.Array:
    """Pallas equivalent of Chomp1d(chomp_size)(x) for x of shape (N, C, L)."""
    assert chomp_size > 0, "chomp_size must be positive (matches x[:, :, :-k])"
    n, c, l = x.shape
    l_out = l - chomp_size
    assert l_out > 0, "chomp_size must be smaller than the sequence length"

    m = n * c
    itemsize = jnp.dtype(x.dtype).itemsize
    total_out_bytes = m * l_out * itemsize

    # Bypass: this op is a free slice that XLA can fuse into its consumer; a
    # Pallas launch only pays off for large, unfused copies.
    if not force_pallas and total_out_bytes < min_pallas_bytes:
        return x[:, :, :l_out]

    x2 = x.reshape(m, l)  # free for contiguous NCL layout
    cost = pl.CostEstimate(flops=0, transcendentals=0,
                           bytes_accessed=2 * total_out_bytes)

    if mode == "dma":
        n_chunks = min(4, m)
        bounds = []
        for k in range(n_chunks):
            lo, hi = (k * m) // n_chunks, ((k + 1) * m) // n_chunks
            if hi > lo:
                bounds.append((lo, hi))
        kernel = functools.partial(_chomp_dma_kernel, l_out=l_out,
                                   row_bounds=tuple(bounds))
        out2 = pl.pallas_call(
            kernel,
            out_shape=jax.ShapeDtypeStruct((m, l_out), x.dtype),
            in_specs=[pl.BlockSpec(memory_space=pl.ANY)],
            out_specs=pl.BlockSpec(memory_space=pl.ANY),
            scratch_shapes=[pltpu.SemaphoreType.DMA((len(bounds),))],
            cost_estimate=cost,
        )(x2)
        return out2.reshape(n, c, l_out)

    sublane = _sublane_multiple(x.dtype)
    tm, tl = _choose_tiles(m, l_out, itemsize, sublane, block_rows, block_cols,
                           vmem_budget_bytes, total_out_bytes)
    grid_m, grid_l = _cdiv(m, tm), _cdiv(l_out, tl)

    if grid_l == 1:
        grid = (grid_m,)
        in_specs = [pl.BlockSpec((tm, tl), lambda i: (i, 0))]
        out_specs = pl.BlockSpec((tm, tl), lambda i: (i, 0))
        dims = ("parallel",)
    else:
        grid = (grid_m, grid_l)
        in_specs = [pl.BlockSpec((tm, tl), lambda i, j: (i, j))]
        out_specs = pl.BlockSpec((tm, tl), lambda i, j: (i, j))
        dims = ("parallel", "parallel")

    out2 = pl.pallas_call(
        _chomp_copy_kernel,
        out_shape=jax.ShapeDtypeStruct((m, l_out), x.dtype),
        grid_spec=pltpu.PrefetchScalarGridSpec(
            num_scalar_prefetch=0, grid=grid,
            in_specs=in_specs, out_specs=out_specs),
        compiler_params=pltpu.CompilerParams(
            dimension_semantics=dims,
            # Double-buffered in+out tiles are <= 32 MiB by construction; 48 MiB
            # stays under v7x's 64 MiB physical VMEM and raises the 16/32 MiB
            # scoped defaults on v5e/v6e so large tiles compile everywhere.
            vmem_limit_bytes=48 << 20,
        ),
        cost_estimate=cost,
    )(x2)
    return out2.reshape(n, c, l_out)


if __name__ == "__main__":
    key = jax.random.PRNGKey(0)

    # 1) Small (N, C, L) f32: single full-width block, l_out < 128 (masked edge).
    N, C, L, cs = 2, 4, 16, 3
    x = jax.random.normal(key, (N, C, L), dtype=jnp.float32)
    y = jax.block_until_ready(chomp1d(x, cs, force_pallas=True))
    assert y.shape == (N, C, L - cs), y.shape
    assert jnp.array_equal(y, x[:, :, :-cs]), "mismatch vs reference slice"

    # 2) Forced 2-D tiling: partial edge blocks along both grid axes.
    N2, C2, L2, cs2 = 2, 7, 300, 5
    x2 = jax.random.normal(jax.random.PRNGKey(0), (N2, C2, L2), dtype=jnp.float32)
    y2 = jax.block_until_ready(
        chomp1d(x2, cs2, block_rows=8, block_cols=128, force_pallas=True))
    assert y2.shape == (N2, C2, L2 - cs2), y2.shape
    assert jnp.array_equal(y2, x2[:, :, :-cs2]), "mismatch on 2-D tiled path"

    # 3) bf16: dtype-aware sublane multiple -> (16, 128) minimum tile.
    xb = jax.random.normal(jax.random.PRNGKey(0), (N, C, L)).astype(jnp.bfloat16)
    yb = jax.block_until_ready(chomp1d(xb, cs, force_pallas=True))
    assert jnp.array_equal(yb, xb[:, :, :-cs]), "mismatch on bf16 path"

    # 4) Direct HBM->HBM strided-DMA variant (no VMEM bounce).
    y3 = jax.block_until_ready(chomp1d(x2, cs2, mode="dma", force_pallas=True))
    assert y3.shape == (N2, C2, L2 - cs2), y3.shape
    assert jnp.array_equal(y3, x2[:, :, :-cs2]), "mismatch on direct-DMA path"

    print("KERNEL_OK")
</pallas_src>

<mosaic_0001>
module attributes {stable_mosaic.version = 11 : i64} {
  func.func @_chomp_copy_kernel(%arg0: i32, %arg1: memref<8x128xf32, #tpu.memory_space<vmem>>, %arg2: memref<8x128xf32, #tpu.memory_space<vmem>>) attributes {dimension_semantics = [#tpu.dimension_semantics<parallel>], iteration_bounds = array<i64: 1>, scalar_prefetch = 0 : i64, scratch_operands = 0 : i64, tpu.core_type = #tpu.core_type<tc>, window_params = [{transform_indices = @transform_0, window_bounds = array<i64: 8, 128>}, {transform_indices = @transform_1, window_bounds = array<i64: 8, 128>}]} {
    %c0 = arith.constant 0 : index
    %c0_0 = arith.constant 0 : index
    %0 = vector.load %arg1[%c0, %c0_0] : memref<8x128xf32, #tpu.memory_space<vmem>>, vector<8x128xf32>
    %c0_1 = arith.constant 0 : index
    %c0_2 = arith.constant 0 : index
    %1 = vector.load %arg2[%c0_1, %c0_2] : memref<8x128xf32, #tpu.memory_space<vmem>>, vector<8x128xf32>
    tpu.vector_store %arg2[%c0_1, %c0_2], %0 {strides = array<i32>} : memref<8x128xf32, #tpu.memory_space<vmem>>, vector<8x128xf32>,
    return
  }
  func.func @transform_0(%arg0: i32) -> (i32, i32) {
    %c0_i32 = arith.constant 0 : i32
    %c0_i32_0 = arith.constant 0 : i32
    return %arg0, %c0_i32 : i32, i32
  }
  func.func @transform_1(%arg0: i32) -> (i32, i32) {
    %c0_i32 = arith.constant 0 : i32
    %c0_i32_0 = arith.constant 0 : i32
    return %arg0, %c0_i32 : i32, i32
  }
}

</mosaic_0001>

<llo_original>
// kernel: tpu_custom_call.1
$region0: #{tpu_custom_call.1}
  #allocation0 [shape = 'u32[]', space=smem, size = 0x4, offset = 0x4, fixed_abs, tag = 'smem constant byte address 0x4 - core index']
  #allocation1 [shape = 'u32[72,128]{1,0:T(1,128)}', space=vmem, size = 0x9000, scoped, tag = 'internal scratch']
  %s0 = inlined_call_operand.hbm [shape: f32[8,16], index: 0, kind: input, shape index: {}]
  %s1 = inlined_call_operand.hbm [shape: f32[8,13], index: 1, kind: output, shape index: {}]
  %s2 = sld [smem:[#allocation0]]
  $region18: #{tpu_custom_call.1} parent=0
    _
  %s4 = ssub.s32 1, %s2
  %s5 = scalar_select 0, %s4, %s2
  $region1: #{tpu_custom_call.1} parent=0
    #allocation2 [shape = 'u8[4096]{0}', space=vmem, size = 0x1000, scoped, tag = 'input window, operand 0, single buffered']
    #allocation3 [shape = 's32[1]{0}', space=sflag, size = 0x4, scoped, tag = 'scoped memory for tpu_custom_call.1']
    #allocation4 [shape = 's32[1]{0}', space=sflag, size = 0x4, scoped, tag = 'scoped memory for tpu_custom_call.1']
    #allocation5 [shape = 'u8[4096]{0}', space=vmem, size = 0x1000, scoped, tag = 'output window, operand 0, single buffered']
    %6 = vsyncpa [#allocation3], 0
    %7 = vsyncpa [#allocation4], 0
    // Predicated region
    $region2: #{tpu_custom_call.1} parent=1 // pred_check
      _
    $region3: #{tpu_custom_call.1} parent=1 // pred_check_branch
      %9 = sbr.rel (0) target = $region5
    $region4: #{tpu_custom_call.1} parent=1 // pred_region
      %11 = vsyncadd [#allocation3], 0
      %s13 = sshll.u32 %s0, 4
      %s14 = int_to_ptr.hbm [resolvable:$true] %s13
      %s15 = sshll.u32 [#allocation2], 4
      %s16 = int_to_ptr.vmem [resolvable:$true] %s15
      %18 = dma.hbm_to_vmem [thread:$0]  %s14, 128, %s16, [#allocation3]
    $region5: #{tpu_custom_call.1} parent=1 // pred_fallthru
      _
    // Predicated region
    $region6: #{tpu_custom_call.1} parent=1 // pred_check
      _
    $region7: #{tpu_custom_call.1} parent=1 // pred_check_branch
      %20 = sbr.rel (0) target = $region9
    $region8: #{tpu_custom_call.1} parent=1 // pred_region
      %22 = dma.done [#allocation3], 128
    $region9: #{tpu_custom_call.1} parent=1 // pred_fallthru
      _
    %v23 = vld [vmem:[#allocation2] sm:$0xff]
    %24 = vst [vmem:[#allocation5] sm:$0xff] %v23
    // Predicated region
    $region10: #{tpu_custom_call.1} parent=1 // pred_check
      _
    $region11: #{tpu_custom_call.1} parent=1 // pred_check_branch
      %26 = sbr.rel (0) target = $region13
    $region12: #{tpu_custom_call.1} parent=1 // pred_region
      %28 = vsyncadd [#allocation4], 0
      %s30 = sshll.u32 [#allocation5], 4
      %s31 = int_to_ptr.vmem [resolvable:$true] %s30
      %s32 = sshll.u32 %s1, 4
      %s33 = int_to_ptr.hbm [resolvable:$true] %s32
      %35 = dma.vmem_to_hbm [thread:$0]  %s31, 128, %s33, [#allocation4]
    $region13: #{tpu_custom_call.1} parent=1 // pred_fallthru
      _
    // Predicated region
    $region14: #{tpu_custom_call.1} parent=1 // pred_check
      _
    $region15: #{tpu_custom_call.1} parent=1 // pred_check_branch
      %37 = sbr.rel (0) target = $region17
    $region16: #{tpu_custom_call.1} parent=1 // pred_region
      %39 = dma.done [#allocation4], 128
    $region17: #{tpu_custom_call.1} parent=1 // pred_fallthru
      _
    %40 = vsyncpa [#allocation3], 1
    %41 = vsyncpa [#allocation4], 1

</llo_original>
